<compile_context>
chip_gen: v7x
topology: tpu7x:2x2x1
jax: 0.10.0
libtpu: 0.0.40
codegen_flags: <defaults>
</compile_context>

<pallas_src>
import jax
import jax.numpy as jnp
from jax.experimental import pallas as pl
from jax.experimental.pallas import tpu as pltpu

HIDDEN = 64


def critic_kernel(xa_ref, w1_ref, b1_ref, w2h_ref, w2a_ref, b2_ref,
                  w3_ref, b3_ref, o_ref):
    xa = xa_ref[...]                                   # [TB, OBS+ACT]

    # Layer 1: Linear(obs, 64) + ReLU.  w1_ref has zero rows for the action
    # columns of xa, so xa @ w1 == x @ W1  exactly.
    h1 = jnp.dot(xa, w1_ref[...], preferred_element_type=jnp.float32)
    h1 = jnp.maximum(h1 + b1_ref[...], 0.0)

    # Layer 2: Linear(64+act, 64) + ReLU.  concat([h1, a]) @ W2 is expressed
    # as h1 @ W2[:64] + xa @ W2a_padded (obs rows of W2a_padded are zero).
    h2 = (jnp.dot(h1, w2h_ref[...], preferred_element_type=jnp.float32)
          + jnp.dot(xa, w2a_ref[...], preferred_element_type=jnp.float32))
    h2 = jnp.maximum(h2 + b2_ref[...], 0.0)

    # Layer 3: Linear(64, 1) as a VPU multiply + lane reduction (an N=1 MXU
    # pass would use <1% of the systolic array).
    out = jnp.sum(h2 * w3_ref[...], axis=-1, keepdims=True)
    o_ref[...] = out + b3_ref[...]


def critic_forward(x, actions, packed_params, *, tile_b=1024):
    """packed_params: (w1f, b1, w2h, w2af, b2, w3_row, b3) — see pack_params."""
    (w1f, b1, w2h, w2af, b2, w3_row, b3) = packed_params
    B = x.shape[0]

    # Fuse observations + actions into one lane-packed input array.
    xa = jnp.concatenate([x, actions], axis=1).astype(jnp.float32)
    feat = xa.shape[1]

    # Batch tile: large enough to amortize per-grid-step overhead, but capped
    # at (B rounded up to 8) so tiny demo batches still work. Pad B to a
    # multiple of the tile.
    tb = min(int(tile_b), ((B + 7) // 8) * 8)
    pad = (-B) % tb
    if pad:
        xa = jnp.pad(xa, ((0, pad), (0, 0)))
    bp = B + pad
    grid = (bp // tb,)

    def resident(arr):
        # Full-array block with a constant index map: DMA'd once, stays
        # VMEM-resident across all batch tiles.
        return pl.BlockSpec(arr.shape, lambda i: (0, 0))

    out = pl.pallas_call(
        critic_kernel,
        out_shape=jax.ShapeDtypeStruct((bp, 1), jnp.float32),
        grid=grid,
        in_specs=[
            pl.BlockSpec((tb, feat), lambda i: (i, 0)),   # fused input tile
            resident(w1f), resident(b1),
            resident(w2h), resident(w2af), resident(b2),
            resident(w3_row), resident(b3),
        ],
        out_specs=pl.BlockSpec((tb, 1), lambda i: (i, 0)),
        compiler_params=pltpu.CompilerParams(
            dimension_semantics=("parallel",),
        ),
    )(xa, w1f, b1, w2h, w2af, b2, w3_row, b3)

    return out[:B]


def init_params(key, obs_dim, act_dim, hidden=HIDDEN):
    """PyTorch-convention params: W is (out, in), b is (out,), uniform +/- 1/sqrt(fan_in)."""
    ks = jax.random.split(key, 6)

    def linear(kw, kb, fan_in, fan_out):
        bound = 1.0 / jnp.sqrt(jnp.float32(fan_in))
        w = jax.random.uniform(kw, (fan_out, fan_in), jnp.float32, -bound, bound)
        b = jax.random.uniform(kb, (fan_out,), jnp.float32, -bound, bound)
        return w, b

    w1, b1 = linear(ks[0], ks[1], obs_dim, hidden)
    w2, b2 = linear(ks[2], ks[3], hidden + act_dim, hidden)
    w3, b3 = linear(ks[4], ks[5], hidden, 1)
    return {"w1": w1, "b1": b1, "w2": w2, "b2": b2, "w3": w3, "b3": b3}


def pack_params(p, obs_dim, act_dim):
    """Convert PyTorch-layout params to the kernel layout.

    The kernel consumes one fused input xa = [x | actions], so:
      * W1 is transposed to (obs, 64) and zero-padded with act_dim rows.
      * W2 (transposed to (64+act, 64)) is split: hidden rows stay as w2h;
        the act rows are placed in a (obs+act, 64) matrix whose obs rows are
        zero, so xa @ w2af == actions @ W2[:, 64:].T   exactly.
    """
    hidden = p["w1"].shape[0]
    feat = obs_dim + act_dim

    w1_t = p["w1"].T                       # (obs, hidden)
    w1f = jnp.zeros((feat, hidden), jnp.float32).at[:obs_dim].set(w1_t)

    w2_t = p["w2"].T                       # (hidden+act, hidden)
    w2h = w2_t[:hidden]                    # (hidden, hidden)
    w2af = jnp.zeros((feat, hidden), jnp.float32).at[obs_dim:].set(w2_t[hidden:])

    b1 = p["b1"].reshape(1, hidden)
    b2 = p["b2"].reshape(1, hidden)
    w3_row = p["w3"].reshape(1, hidden)    # (1, hidden)
    b3 = p["b3"].reshape(1, 1)
    return (w1f, b1, w2h, w2af, b2, w3_row, b3)


def critic_reference(x, actions, p):
    """Plain-JAX reference matching the PyTorch forward exactly."""
    h1 = jnp.maximum(x @ p["w1"].T + p["b1"], 0.0)
    cat = jnp.concatenate([h1, actions], axis=1)
    h2 = jnp.maximum(cat @ p["w2"].T + p["b2"], 0.0)
    return h2 @ p["w3"].T + p["b3"]


if __name__ == "__main__":
    B, OBS, ACT = 8, 24, 4   # BipedalWalker-like dims, small demo batch

    key = jax.random.PRNGKey(0)
    k_x, k_a, k_p = jax.random.split(key, 3)
    x = jax.random.normal(k_x, (B, OBS), jnp.float32)
    actions = jax.random.normal(k_a, (B, ACT), jnp.float32)

    torch_style_params = init_params(k_p, OBS, ACT)
    packed = pack_params(torch_style_params, OBS, ACT)

    out = critic_forward(x, actions, packed)
    out = jax.block_until_ready(out)

    ref = critic_reference(x, actions, torch_style_params)
    assert out.shape == (B, 1), out.shape
    assert jnp.allclose(out, ref, atol=1e-5, rtol=1e-5), (out, ref)

    print("KERNEL_OK")
</pallas_src>

<mosaic_0001>
module attributes {stable_mosaic.version = 11 : i64} {
  func.func @critic_kernel(%arg0: i32, %arg1: memref<8x28xf32, #tpu.memory_space<vmem>>, %arg2: memref<28x64xf32, #tpu.memory_space<vmem>>, %arg3: memref<1x64xf32, #tpu.memory_space<vmem>>, %arg4: memref<64x64xf32, #tpu.memory_space<vmem>>, %arg5: memref<28x64xf32, #tpu.memory_space<vmem>>, %arg6: memref<1x64xf32, #tpu.memory_space<vmem>>, %arg7: memref<1x64xf32, #tpu.memory_space<vmem>>, %arg8: memref<1x1xf32, #tpu.memory_space<vmem>>, %arg9: memref<8x1xf32, #tpu.memory_space<vmem>>) attributes {dimension_semantics = [#tpu.dimension_semantics<parallel>], iteration_bounds = array<i64: 1>, scalar_prefetch = 0 : i64, scratch_operands = 0 : i64, tpu.core_type = #tpu.core_type<tc>, window_params = [{transform_indices = @transform_0, window_bounds = array<i64: 8, 28>}, {pipeline_mode = #tpu.pipeline_mode<synchronous>, transform_indices = @transform_1, window_bounds = array<i64: 28, 64>}, {pipeline_mode = #tpu.pipeline_mode<synchronous>, transform_indices = @transform_2, window_bounds = array<i64: 1, 64>}, {pipeline_mode = #tpu.pipeline_mode<synchronous>, transform_indices = @transform_3, window_bounds = array<i64: 64, 64>}, {pipeline_mode = #tpu.pipeline_mode<synchronous>, transform_indices = @transform_4, window_bounds = array<i64: 28, 64>}, {pipeline_mode = #tpu.pipeline_mode<synchronous>, transform_indices = @transform_5, window_bounds = array<i64: 1, 64>}, {pipeline_mode = #tpu.pipeline_mode<synchronous>, transform_indices = @transform_6, window_bounds = array<i64: 1, 64>}, {pipeline_mode = #tpu.pipeline_mode<synchronous>, transform_indices = @transform_7, window_bounds = array<i64: 1, 1>}, {transform_indices = @transform_8, window_bounds = array<i64: 8, 1>}]} {
    %c0 = arith.constant 0 : index
    %c0_0 = arith.constant 0 : index
    %0 = vector.load %arg1[%c0, %c0_0] : memref<8x28xf32, #tpu.memory_space<vmem>>, vector<8x28xf32>
    %c0_1 = arith.constant 0 : index
    %c0_2 = arith.constant 0 : index
    %1 = vector.load %arg2[%c0_1, %c0_2] : memref<28x64xf32, #tpu.memory_space<vmem>>, vector<28x64xf32>
    %cst = arith.constant dense<0.000000e+00> : vector<8x64xf32>
    %2 = tpu.matmul %0, %1, %cst {dimension_numbers = #tpu.dot_dimension_numbers<[1], [0], [0], [1], [0, 0, 1, 1], [], []>} : vector<8x28xf32>, vector<28x64xf32>, vector<8x64xf32> -> vector<8x64xf32>
    %c0_3 = arith.constant 0 : index
    %c0_4 = arith.constant 0 : index
    %3 = vector.load %arg3[%c0_3, %c0_4] : memref<1x64xf32, #tpu.memory_space<vmem>>, vector<1x64xf32>
    %4 = vector.broadcast %3 : vector<1x64xf32> to vector<8x64xf32>
    %5 = arith.addf %2, %4 : vector<8x64xf32>
    %cst_5 = arith.constant 0.000000e+00 : f32
    %6 = vector.broadcast %cst_5 : f32 to vector<8x64xf32>
    %7 = arith.maximumf %5, %6 : vector<8x64xf32>
    %c0_6 = arith.constant 0 : index
    %c0_7 = arith.constant 0 : index
    %8 = vector.load %arg4[%c0_6, %c0_7] : memref<64x64xf32, #tpu.memory_space<vmem>>, vector<64x64xf32>
    %cst_8 = arith.constant dense<0.000000e+00> : vector<8x64xf32>
    %9 = tpu.matmul %7, %8, %cst_8 {dimension_numbers = #tpu.dot_dimension_numbers<[1], [0], [0], [1], [0, 0, 1, 1], [], []>} : vector<8x64xf32>, vector<64x64xf32>, vector<8x64xf32> -> vector<8x64xf32>
    %c0_9 = arith.constant 0 : index
    %c0_10 = arith.constant 0 : index
    %10 = vector.load %arg5[%c0_9, %c0_10] : memref<28x64xf32, #tpu.memory_space<vmem>>, vector<28x64xf32>
    %cst_11 = arith.constant dense<0.000000e+00> : vector<8x64xf32>
    %11 = tpu.matmul %0, %10, %cst_11 {dimension_numbers = #tpu.dot_dimension_numbers<[1], [0], [0], [1], [0, 0, 1, 1], [], []>} : vector<8x28xf32>, vector<28x64xf32>, vector<8x64xf32> -> vector<8x64xf32>
    %12 = arith.addf %9, %11 : vector<8x64xf32>
    %c0_12 = arith.constant 0 : index
    %c0_13 = arith.constant 0 : index
    %13 = vector.load %arg6[%c0_12, %c0_13] : memref<1x64xf32, #tpu.memory_space<vmem>>, vector<1x64xf32>
    %14 = vector.broadcast %13 : vector<1x64xf32> to vector<8x64xf32>
    %15 = arith.addf %12, %14 : vector<8x64xf32>
    %cst_14 = arith.constant 0.000000e+00 : f32
    %16 = vector.broadcast %cst_14 : f32 to vector<8x64xf32>
    %17 = arith.maximumf %15, %16 : vector<8x64xf32>
    %c0_15 = arith.constant 0 : index
    %c0_16 = arith.constant 0 : index
    %18 = vector.load %arg7[%c0_15, %c0_16] : memref<1x64xf32, #tpu.memory_space<vmem>>, vector<1x64xf32>
    %19 = vector.broadcast %18 : vector<1x64xf32> to vector<8x64xf32>
    %20 = arith.mulf %17, %19 : vector<8x64xf32>
    %cst_17 = arith.constant dense<0.000000e+00> : vector<8xf32>
    %21 = vector.multi_reduction <add>, %20, %cst_17 [1] : vector<8x64xf32> to vector<8xf32>
    %22 = vector.shape_cast %21 : vector<8xf32> to vector<8x1xf32>
    %c0_18 = arith.constant 0 : index
    %c0_19 = arith.constant 0 : index
    %23 = vector.load %arg8[%c0_18, %c0_19] : memref<1x1xf32, #tpu.memory_space<vmem>>, vector<1x1xf32>
    %24 = vector.broadcast %23 : vector<1x1xf32> to vector<8x1xf32>
    %25 = arith.addf %22, %24 : vector<8x1xf32>
    %c0_20 = arith.constant 0 : index
    %c0_21 = arith.constant 0 : index
    %26 = vector.load %arg9[%c0_20, %c0_21] : memref<8x1xf32, #tpu.memory_space<vmem>>, vector<8x1xf32>
    tpu.vector_store %arg9[%c0_20, %c0_21], %25 {strides = array<i32>} : memref<8x1xf32, #tpu.memory_space<vmem>>, vector<8x1xf32>,
    return
  }
  func.func @transform_0(%arg0: i32) -> (i32, i32) {
    %c0_i32 = arith.constant 0 : i32
    %c0_i32_0 = arith.constant 0 : i32
    return %arg0, %c0_i32 : i32, i32
  }
  func.func @transform_1(%arg0: i32) -> (i32, i32) {
    %c0_i32 = arith.constant 0 : i32
    %c0_i32_0 = arith.constant 0 : i32
    %c0_i32_1 = arith.constant 0 : i32
    return %c0_i32, %c0_i32_0 : i32, i32
  }
  func.func @transform_2(%arg0: i32) -> (i32, i32) {
    %c0_i32 = arith.constant 0 : i32
    %c0_i32_0 = arith.constant 0 : i32
    %c0_i32_1 = arith.constant 0 : i32
    return %c0_i32, %c0_i32_0 : i32, i32
  }
  func.func @transform_3(%arg0: i32) -> (i32, i32) {
    %c0_i32 = arith.constant 0 : i32
    %c0_i32_0 = arith.constant 0 : i32
    %c0_i32_1 = arith.constant 0 : i32
    return %c0_i32, %c0_i32_0 : i32, i32
  }
  func.func @transform_4(%arg0: i32) -> (i32, i32) {
    %c0_i32 = arith.constant 0 : i32
    %c0_i32_0 = arith.constant 0 : i32
    %c0_i32_1 = arith.constant 0 : i32
    return %c0_i32, %c0_i32_0 : i32, i32
  }
  func.func @transform_5(%arg0: i32) -> (i32, i32) {
    %c0_i32 = arith.constant 0 : i32
    %c0_i32_0 = arith.constant 0 : i32
    %c0_i32_1 = arith.constant 0 : i32
    return %c0_i32, %c0_i32_0 : i32, i32
  }
  func.func @transform_6(%arg0: i32) -> (i32, i32) {
    %c0_i32 = arith.constant 0 : i32
    %c0_i32_0 = arith.constant 0 : i32
    %c0_i32_1 = arith.constant 0 : i32
    return %c0_i32, %c0_i32_0 : i32, i32
  }
  func.func @transform_7(%arg0: i32) -> (i32, i32) {
    %c0_i32 = arith.constant 0 : i32
    %c0_i32_0 = arith.constant 0 : i32
    %c0_i32_1 = arith.constant 0 : i32
    return %c0_i32, %c0_i32_0 : i32, i32
  }
  func.func @transform_8(%arg0: i32) -> (i32, i32) {
    %c0_i32 = arith.constant 0 : i32
    %c0_i32_0 = arith.constant 0 : i32
    return %arg0, %c0_i32 : i32, i32
  }
}

</mosaic_0001>

<llo_original>
// kernel: tpu_custom_call.1
$region0: #{tpu_custom_call.1}
  #allocation0 [shape = 'u32[]', space=smem, size = 0x4, offset = 0x4, fixed_abs, tag = 'smem constant byte address 0x4 - core index']
  #allocation1 [shape = 'u32[144,128]{1,0:T(1,128)}', space=vmem, size = 0x12000, scoped, tag = 'internal scratch']
  #allocation2 [shape = 'f32[1,1]{1,0:T(1,128)S(1)}', space=vmem, size = 0x200, scoped, tag = 'scoped memory for tpu_custom_call.1']
  %s0 = inlined_call_operand.hbm [shape: f32[8,28], index: 0, kind: input, shape index: {}]
  %s1 = inlined_call_operand.hbm [shape: f32[28,64], index: 1, kind: input, shape index: {}]
  %s2 = inlined_call_operand.vmem [shape: f32[1,64], index: 2, kind: input, shape index: {}]
  %s3 = inlined_call_operand.hbm [shape: f32[64,64], index: 3, kind: input, shape index: {}]
  %s4 = inlined_call_operand.hbm [shape: f32[28,64], index: 4, kind: input, shape index: {}]
  %s5 = inlined_call_operand.vmem [shape: f32[1,64], index: 5, kind: input, shape index: {}]
  %s6 = inlined_call_operand.vmem [shape: f32[1,64], index: 6, kind: input, shape index: {}]
  %s7 = inlined_call_operand.<no memory space> [shape: f32[1,1], index: 7, kind: input, shape index: {}]
  %s8 = inlined_call_operand.vmem [shape: f32[8,1], index: 8, kind: output, shape index: {}]
  %s9 = sld [smem:[#allocation0]]
  $region58: #{tpu_custom_call.1} parent=0
    _
  %s11 = ssub.s32 1, %s9
  %s12 = scalar_select 0, %s11, %s9
  %v13 = vstv %s7
  %14 = vst [vmem:[#allocation2] sm:$0x1] %v13
  $region1: #{tpu_custom_call.1} parent=0
    #allocation3 [shape = 'u8[4096]{0}', space=vmem, size = 0x1000, scoped, tag = 'input window, operand 0, single buffered']
    #allocation4 [shape = 's32[1]{0}', space=sflag, size = 0x4, scoped, tag = 'scoped memory for tpu_custom_call.1']
    #allocation5 [shape = 'u8[16384]{0}', space=vmem, size = 0x4000, scoped, tag = 'input window, operand 1, single buffered']
    #allocation6 [shape = 's32[1]{0}', space=sflag, size = 0x4, scoped, tag = 'scoped memory for tpu_custom_call.1']
    #allocation7 [shape = 'u8[32768]{0}', space=vmem, size = 0x8000, scoped, tag = 'input window, operand 3, single buffered']
    #allocation8 [shape = 'u8[16384]{0}', space=vmem, size = 0x4000, scoped, tag = 'input window, operand 4, single buffered']
    #allocation9 [shape = 's32[1]{0}', space=sflag, size = 0x4, scoped, tag = 'scoped memory for tpu_custom_call.1']
    %15 = vsyncpa [#allocation4], 0
    %16 = vsyncpa [#allocation6], 0
    %17 = vsyncpa [#allocation9], 0
    // Predicated region
    $region2: #{tpu_custom_call.1} parent=1 // pred_check
      _
    $region3: #{tpu_custom_call.1} parent=1 // pred_check_branch
      %19 = sbr.rel (0) target = $region5
    $region4: #{tpu_custom_call.1} parent=1 // pred_region
      %s21 = ssub.s32 128, 128
      %22 = vsyncadd [#allocation4], %s21
      %s24 = sshll.u32 [#allocation3], 4
      %s25 = int_to_ptr.vmem [resolvable:$true] %s24
      %27 = dma.hbm_to_vmem [thread:$0]  %s0, 128, %s25, [#allocation4]
    $region5: #{tpu_custom_call.1} parent=1 // pred_fallthru
      _
    // Predicated region
    $region6: #{tpu_custom_call.1} parent=1 // pred_check
      _
    $region7: #{tpu_custom_call.1} parent=1 // pred_check_branch
      %29 = sbr.rel (0) target = $region9
    $region8: #{tpu_custom_call.1} parent=1 // pred_region
      %s31 = ssub.s32 512, 512
      %32 = vsyncadd [#allocation6], %s31
      %s33 = sshll.u32 [#allocation5], 4
      %s34 = int_to_ptr.vmem [resolvable:$true] %s33
      %39 = dma.hbm_to_vmem [thread:$0]  %s1, 512, %s34, [#allocation6], 128, 128, 8
    $region9: #{tpu_custom_call.1} parent=1 // pred_fallthru
      _
    // Predicated region
    $region10: #{tpu_custom_call.1} parent=1 // pred_check
      _
    $region11: #{tpu_custom_call.1} parent=1 // pred_check_branch
      %41 = sbr.rel (0) target = $region13
    $region12: #{tpu_custom_call.1} parent=1 // pred_region
      _
    $region13: #{tpu_custom_call.1} parent=1 // pred_fallthru
      _
    // Predicated region
    $region14: #{tpu_custom_call.1} parent=1 // pred_check
      _
    $region15: #{tpu_custom_call.1} parent=1 // pred_check_branch
      %43 = sbr.rel (0) target = $region17
    $region16: #{tpu_custom_call.1} parent=1 // pred_region
      %s45 = ssub.s32 1024, 1024
      %46 = vsyncadd [#allocation6], %s45
      %s47 = sshll.u32 [#allocation7], 4
      %s48 = int_to_ptr.vmem [resolvable:$true] %s47
      %53 = dma.hbm_to_vmem [thread:$0]  %s3, 1024, %s48, [#allocation6], 128, 128, 8
    $region17: #{tpu_custom_call.1} parent=1 // pred_fallthru
      _
    // Predicated region
    $region18: #{tpu_custom_call.1} parent=1 // pred_check
      _
    $region19: #{tpu_custom_call.1} parent=1 // pred_check_branch
      %55 = sbr.rel (0) target = $region21
    $region20: #{tpu_custom_call.1} parent=1 // pred_region
      %s57 = ssub.s32 512, 512
      %58 = vsyncadd [#allocation9], %s57
      %s59 = sshll.u32 [#allocation8], 4
      %s60 = int_to_ptr.vmem [resolvable:$true] %s59
      %65 = dma.hbm_to_vmem [thread:$0]  %s4, 512, %s60, [#allocation9], 128, 128, 8
    $region21: #{tpu_custom_call.1} parent=1 // pred_fallthru
      _
    // Predicated region
    $region22: #{tpu_custom_call.1} parent=1 // pred_check
      _
    $region23: #{tpu_custom_call.1} parent=1 // pred_check_branch
      %67 = sbr.rel (0) target = $region25
    $region24: #{tpu_custom_call.1} parent=1 // pred_region
      _
    $region25: #{tpu_custom_call.1} parent=1 // pred_fallthru
      _
    // Predicated region
    $region26: #{tpu_custom_call.1} parent=1 // pred_check
      _
    $region27: #{tpu_custom_call.1} parent=1 // pred_check_branch
      %69 = sbr.rel (0) target = $region29
    $region28: #{tpu_custom_call.1} parent=1 // pred_region
      _
    $region29: #{tpu_custom_call.1} parent=1 // pred_fallthru
      _
    // Predicated region
    $region30: #{tpu_custom_call.1} parent=1 // pred_check
      _
    $region31: #{tpu_custom_call.1} parent=1 // pred_check_branch
      %71 = sbr.rel (0) target = $region33
    $region32: #{tpu_custom_call.1} parent=1 // pred_region
      _
    $region33: #{tpu_custom_call.1} parent=1 // pred_fallthru
      _
    // Predicated region
    $region34: #{tpu_custom_call.1} parent=1 // pred_check
      _
    $region35: #{tpu_custom_call.1} parent=1 // pred_check_branch
      %73 = sbr.rel (0) target = $region37
    $region36: #{tpu_custom_call.1} parent=1 // pred_region
      %74 = dma.done [#allocation4], 128
    $region37: #{tpu_custom_call.1} parent=1 // pred_fallthru
      _
    // Predicated region
    $region38: #{tpu_custom_call.1} parent=1 // pred_check
      _
    $region39: #{tpu_custom_call.1} parent=1 // pred_check_branch
      %76 = sbr.rel (0) target = $region41
    $region40: #{tpu_custom_call.1} parent=1 // pred_region
      %77 = dma.done [#allocation6], 512
    $region41: #{tpu_custom_call.1} parent=1 // pred_fallthru
      _
    // Predicated region
    $region42: #{tpu_custom_call.1} parent=1 // pred_check
      _
    $region43: #{tpu_custom_call.1} parent=1 // pred_check_branch
      %79 = sbr.rel (0) target = $region45
    $region44: #{tpu_custom_call.1} parent=1 // pred_region
      %80 = dma.done [#allocation6], 1024
    $region45: #{tpu_custom_call.1} parent=1 // pred_fallthru
      _
    // Predicated region
    $region46: #{tpu_custom_call.1} parent=1 // pred_check
      _
    $region47: #{tpu_custom_call.1} parent=1 // pred_check_branch
      %82 = sbr.rel (0) target = $region49
    $region48: #{tpu_custom_call.1} parent=1 // pred_region
      %83 = dma.done [#allocation9], 512
    $region49: #{tpu_custom_call.1} parent=1 // pred_fallthru
      _
    %v84 = vld [vmem:[#allocation3] sm:$0xff]
    %v85 = vld [vmem:[#allocation5] sm:$0xff]
    %v86 = vld [vmem:[#allocation5 + $0x8] sm:$0xff]
    %v87 = vld [vmem:[#allocation5 + $0x10] sm:$0xff]
    %v88 = vld [vmem:[#allocation5 + $0x18] sm:$0xf]
    %v89 = vld [vmem:[%s2] sm:$0x1]
    %v91 = vlaneseq
    %v92 = vshrl.u32 %v91, 7
    %v93 = vsub.s32 0, %v92
    %v94 = vrot.slane %v89, %v93
    %vm96 = vcmask 228352
    %v98 = vsel %vm96, %v84, 0
    %vm100 = vcmask 1043456
    %v102 = vsel %vm100, %v88, 0
    %104 = vmatprep.subr.mxu0 0.0
    %105 = vmatpush1.msra.mxu0 %v85
    %106 = vmatprep.subr.mxu0 0.0
    %107 = vmatpush1.msra.mxu0 %v86
    %108 = vmatprep.subr.mxu0 0.0
    %109 = vmatpush1.msra.mxu0 %v87
    %110 = vmatprep.subr.mxu0 0.0
    %111 = vmatpush1.msra.mxu0 %v102
    %112 = vmatprep.subr.mxu0 0.0
    %113 = vmatpush1.msra.mxu0 0.0
    %114 = vmatprep.subr.mxu0 0.0
    %115 = vmatpush1.msra.mxu0 0.0
    %116 = vmatprep.subr.mxu0 0.0
    %117 = vmatpush1.msra.mxu0 0.0
    %118 = vmatprep.subr.mxu0 0.0
    %119 = vmatpush1.msra.mxu0 0.0
    %120 = vmatprep.subr.mxu0 0.0
    %121 = vmatpush1.msra.mxu0 0.0
    %122 = vmatprep.subr.mxu0 0.0
    %123 = vmatpush1.msra.mxu0 0.0
    %124 = vmatprep.subr.mxu0 0.0
    %125 = vmatpush1.msra.mxu0 0.0
    %126 = vmatprep.subr.mxu0 0.0
    %127 = vmatpush1.msra.mxu0 0.0
    %128 = vmatprep.subr.mxu0 0.0
    %129 = vmatpush1.msra.mxu0 0.0
    %130 = vmatprep.subr.mxu0 0.0
    %131 = vmatpush1.msra.mxu0 0.0
    %132 = vmatprep.subr.mxu0 0.0
    %133 = vmatpush1.msra.mxu0 0.0
    %134 = vmatprep.subr.mxu0 0.0
    %135 = vmatpush1.msra.mxu0 0.0
    %136 = vmatprep.subr.mxu0 0.0
    %137 = vmatpush1.msra.mxu0 0.0
    %138 = vmatprep.subr.mxu0 0.0
    %139 = vmatpush1.msra.mxu0 0.0
    %140 = vmatprep.subr.mxu0 0.0
    %141 = vmatpush1.msra.mxu0 0.0
    %142 = vmatprep.subr.mxu0 0.0
    %143 = vmatpush1.msra.mxu0 0.0
    %144 = vmatprep.subr.mxu0 0.0
    %145 = vmatpush1.msra.mxu0 0.0
    %146 = vmatprep.subr.mxu0 0.0
    %147 = vmatpush1.msra.mxu0 0.0
    %148 = vmatprep.subr.mxu0 0.0
    %149 = vmatpush1.msra.mxu0 0.0
    %150 = vmatprep.subr.mxu0 0.0
    %151 = vmatpush1.msra.mxu0 0.0
    %152 = vmatprep.subr.mxu0 0.0
    %153 = vmatpush1.msra.mxu0 0.0
    %154 = vmatprep.subr.mxu0 0.0
    %155 = vmatpush1.msra.mxu0 0.0
    %156 = vmatprep.subr.mxu0 0.0
    %157 = vmatpush1.msra.mxu0 0.0
    %158 = vmatprep.subr.mxu0 0.0
    %159 = vmatpush1.msra.mxu0 0.0
    %160 = vmatprep.subr.mxu0 0.0
    %161 = vmatpush1.msra.mxu0 0.0
    %162 = vmatprep.subr.mxu0 0.0
    %163 = vmatpush1.msra.mxu0 0.0
    %164 = vmatprep.subr.mxu0 0.0
    %165 = vmatpush1.msra.mxu0 0.0
    %166 = vmatprep.subr.mxu0 0.0
    %167 = vmatpush1.msra.mxu0 0.0
    %168 = vmatprep.mubr.f32.mxu0 0.0
    %169 = vmatmul.mubr.f32.gmra.mrb[0].mxu0 %v98
    %v170 = vpop.f32.mrb[0].mxu0
    %v171 = vadd.f32 %v94, %v170
    %v172 = vpop.f32.mrb[0].mxu0
    %173 = vdwg.mxu0
    %v174 = vmax.f32 %v171, 0.0
    %v175 = vld [vmem:[#allocation7] sm:$0xff]
    %v176 = vld [vmem:[#allocation7 + $0x8] sm:$0xff]
    %v177 = vld [vmem:[#allocation7 + $0x10] sm:$0xff]
    %v178 = vld [vmem:[#allocation7 + $0x18] sm:$0xff]
    %v179 = vld [vmem:[#allocation7 + $0x20] sm:$0xff]
    %v180 = vld [vmem:[#allocation7 + $0x28] sm:$0xff]
    %v181 = vld [vmem:[#allocation7 + $0x30] sm:$0xff]
    %v182 = vld [vmem:[#allocation7 + $0x38] sm:$0xff]
    %v183 = vld [vmem:[#allocation8] sm:$0xff]
    %v184 = vld [vmem:[#allocation8 + $0x8] sm:$0xff]
    %v185 = vld [vmem:[#allocation8 + $0x10] sm:$0xff]
    %v186 = vld [vmem:[#allocation8 + $0x18] sm:$0xf]
    %v188 = vsel %vm100, %v186, 0
    %190 = vmatprep.subr.mxu0 0.0
    %191 = vmatpush1.msra.mxu0 %v183
    %192 = vmatprep.subr.mxu0 0.0
    %193 = vmatpush1.msra.mxu0 %v184
    %194 = vmatprep.subr.mxu0 0.0
    %195 = vmatpush1.msra.mxu0 %v185
    %196 = vmatprep.subr.mxu0 0.0
    %197 = vmatpush1.msra.mxu0 %v188
    %198 = vmatprep.subr.mxu0 0.0
    %199 = vmatpush1.msra.mxu0 0.0
    %200 = vmatprep.subr.mxu0 0.0
    %201 = vmatpush1.msra.mxu0 0.0
    %202 = vmatprep.subr.mxu0 0.0
    %203 = vmatpush1.msra.mxu0 0.0
    %204 = vmatprep.subr.mxu0 0.0
    %205 = vmatpush1.msra.mxu0 0.0
    %206 = vmatprep.subr.mxu0 0.0
    %207 = vmatpush1.msra.mxu0 0.0
    %208 = vmatprep.subr.mxu0 0.0
    %209 = vmatpush1.msra.mxu0 0.0
    %210 = vmatprep.subr.mxu0 0.0
    %211 = vmatpush1.msra.mxu0 0.0
    %212 = vmatprep.subr.mxu0 0.0
    %213 = vmatpush1.msra.mxu0 0.0
    %214 = vmatprep.subr.mxu0 0.0
    %215 = vmatpush1.msra.mxu0 0.0
    %216 = vmatprep.subr.mxu0 0.0
    %217 = vmatpush1.msra.mxu0 0.0
    %218 = vmatprep.subr.mxu0 0.0
    %219 = vmatpush1.msra.mxu0 0.0
    %220 = vmatprep.subr.mxu0 0.0
    %221 = vmatpush1.msra.mxu0 0.0
    %222 = vmatprep.subr.mxu0 0.0
    %223 = vmatpush1.msra.mxu0 0.0
    %224 = vmatprep.subr.mxu0 0.0
    %225 = vmatpush1.msra.mxu0 0.0
    %226 = vmatprep.subr.mxu0 0.0
    %227 = vmatpush1.msra.mxu0 0.0
    %228 = vmatprep.subr.mxu0 0.0
    %229 = vmatpush1.msra.mxu0 0.0
    %230 = vmatprep.subr.mxu0 0.0
    %231 = vmatpush1.msra.mxu0 0.0
    %232 = vmatprep.subr.mxu0 0.0
    %233 = vmatpush1.msra.mxu0 0.0
    %234 = vmatprep.subr.mxu0 0.0
    %235 = vmatpush1.msra.mxu0 0.0
    %236 = vmatprep.subr.mxu0 0.0
    %237 = vmatpush1.msra.mxu0 0.0
    %238 = vmatprep.subr.mxu0 0.0
    %239 = vmatpush1.msra.mxu0 0.0
    %240 = vmatprep.subr.mxu0 0.0
    %241 = vmatpush1.msra.mxu0 0.0
    %242 = vmatprep.subr.mxu0 0.0
    %243 = vmatpush1.msra.mxu0 0.0
    %244 = vmatprep.subr.mxu0 0.0
    %245 = vmatpush1.msra.mxu0 0.0
    %246 = vmatprep.subr.mxu0 0.0
    %247 = vmatpush1.msra.mxu0 0.0
    %248 = vmatprep.subr.mxu0 0.0
    %249 = vmatpush1.msra.mxu0 0.0
    %250 = vmatprep.subr.mxu0 0.0
    %251 = vmatpush1.msra.mxu0 0.0
    %252 = vmatprep.subr.mxu0 0.0
    %253 = vmatpush1.msra.mxu0 0.0
    %254 = vmatprep.mubr.f32.mxu0 0.0
    %255 = vmatmul.mubr.f32.gmra.mrb[0].mxu0 %v98
    %v256 = vpop.f32.mrb[0].mxu0
    %v257 = vadd.f32 0.0, %v256
    %v258 = vpop.f32.mrb[0].mxu0
    %259 = vdwg.mxu0
    %vm260 = vcmask 523264
    %v262 = vsel %vm260, %v174, 0
    %264 = vmatprep.subr.mxu0 0.0
    %265 = vmatpush1.msra.mxu0 %v175
    %266 = vmatprep.subr.mxu0 0.0
    %267 = vmatpush1.msra.mxu0 %v176
    %268 = vmatprep.subr.mxu0 0.0
    %269 = vmatpush1.msra.mxu0 %v177
    %270 = vmatprep.subr.mxu0 0.0
    %271 = vmatpush1.msra.mxu0 %v178
    %272 = vmatprep.subr.mxu0 0.0
    %273 = vmatpush1.msra.mxu0 %v179
    %274 = vmatprep.subr.mxu0 0.0
    %275 = vmatpush1.msra.mxu0 %v180
    %276 = vmatprep.subr.mxu0 0.0
    %277 = vmatpush1.msra.mxu0 %v181
    %278 = vmatprep.subr.mxu0 0.0
    %279 = vmatpush1.msra.mxu0 %v182
    %280 = vmatprep.subr.mxu0 0.0
    %281 = vmatpush1.msra.mxu0 0.0
    %282 = vmatprep.subr.mxu0 0.0
    %283 = vmatpush1.msra.mxu0 0.0
    %284 = vmatprep.subr.mxu0 0.0
    %285 = vmatpush1.msra.mxu0 0.0
    %286 = vmatprep.subr.mxu0 0.0
    %287 = vmatpush1.msra.mxu0 0.0
    %288 = vmatprep.subr.mxu0 0.0
    %289 = vmatpush1.msra.mxu0 0.0
    %290 = vmatprep.subr.mxu0 0.0
    %291 = vmatpush1.msra.mxu0 0.0
    %292 = vmatprep.subr.mxu0 0.0
    %293 = vmatpush1.msra.mxu0 0.0
    %294 = vmatprep.subr.mxu0 0.0
    %295 = vmatpush1.msra.mxu0 0.0
    %296 = vmatprep.subr.mxu0 0.0
    %297 = vmatpush1.msra.mxu0 0.0
    %298 = vmatprep.subr.mxu0 0.0
    %299 = vmatpush1.msra.mxu0 0.0
    %300 = vmatprep.subr.mxu0 0.0
    %301 = vmatpush1.msra.mxu0 0.0
    %302 = vmatprep.subr.mxu0 0.0
    %303 = vmatpush1.msra.mxu0 0.0
    %304 = vmatprep.subr.mxu0 0.0
    %305 = vmatpush1.msra.mxu0 0.0
    %306 = vmatprep.subr.mxu0 0.0
    %307 = vmatpush1.msra.mxu0 0.0
    %308 = vmatprep.subr.mxu0 0.0
    %309 = vmatpush1.msra.mxu0 0.0
    %310 = vmatprep.subr.mxu0 0.0
    %311 = vmatpush1.msra.mxu0 0.0
    %312 = vmatprep.subr.mxu0 0.0
    %313 = vmatpush1.msra.mxu0 0.0
    %314 = vmatprep.subr.mxu0 0.0
    %315 = vmatpush1.msra.mxu0 0.0
    %316 = vmatprep.subr.mxu0 0.0
    %317 = vmatpush1.msra.mxu0 0.0
    %318 = vmatprep.subr.mxu0 0.0
    %319 = vmatpush1.msra.mxu0 0.0
    %320 = vmatprep.subr.mxu0 0.0
    %321 = vmatpush1.msra.mxu0 0.0
    %322 = vmatprep.subr.mxu0 0.0
    %323 = vmatpush1.msra.mxu0 0.0
    %324 = vmatprep.subr.mxu0 0.0
    %325 = vmatpush1.msra.mxu0 0.0
    %326 = vmatprep.subr.mxu0 0.0
    %327 = vmatpush1.msra.mxu0 0.0
    %328 = vmatprep.mubr.f32.mxu0 0.0
    %329 = vmatmul.mubr.f32.gmra.mrb[0].mxu0 %v262
    %v330 = vpop.f32.mrb[0].mxu0
    %v331 = vadd.f32 %v257, %v330
    %v332 = vpop.f32.mrb[0].mxu0
    %333 = vdwg.mxu0
    %v334 = vld [vmem:[%s5] sm:$0x1]
    %v336 = vlaneseq
    %v337 = vshrl.u32 %v336, 7
    %v338 = vsub.s32 0, %v337
    %v339 = vrot.slane %v334, %v338
    %v341 = vadd.f32 %v331, %v339
    %v342 = vmax.f32 %v341, 0.0
    %v343 = vld [vmem:[%s6] sm:$0x1]
    %v345 = vlaneseq
    %v346 = vshrl.u32 %v345, 7
    %v347 = vsub.s32 0, %v346
    %v348 = vrot.slane %v343, %v347
    %v350 = vmul.f32 %v342, %v348
    %v351 = vsel %vm260, %v350, 0.0
    %352 = vadd.xlane.f32.xlu0 %v351
    %v353 = vpop.xlane.xlu0 %352
    %v354 = vld [vmem:[#allocation2] sm:$0x1]
    %v356 = vlaneseq
    %v357 = vshrl.u32 %v356, 7
    %v358 = vsub.s32 0, %v357
    %v359 = vrot.slane %v354, %v358
    %v361 = vadd.f32 %v353, %v359
    %vm362 = vcmask 7168
    %363 = vst.msk [vmem:[%s8] sm:$0xff] %vm362, %v361
    // Predicated region
    $region50: #{tpu_custom_call.1} parent=1 // pred_check
      _
    $region51: #{tpu_custom_call.1} parent=1 // pred_check_branch
      %365 = sbr.rel (0) target = $region53
    $region52: #{tpu_custom_call.1} parent=1 // pred_region
      _
    $region53: #{tpu_custom_call.1} parent=1 // pred_fallthru
      _
    // Predicated region
    $region54: #{tpu_custom_call.1} parent=1 // pred_check
      _
    $region55: #{tpu_custom_call.1} parent=1 // pred_check_branch
      %367 = sbr.rel (0) target = $region57
    $region56: #{tpu_custom_call.1} parent=1 // pred_region
      _
    $region57: #{tpu_custom_call.1} parent=1 // pred_fallthru
      _
    %368 = vsyncpa [#allocation4], 1
    %369 = vsyncpa [#allocation6], 1
    %370 = vsyncpa [#allocation9], 1

</llo_original>
